<compile_context>
chip_gen: v5e
topology: v5e:2x2
jax: 0.10.0
libtpu: 0.0.40
codegen_flags: <defaults>
</compile_context>

<pallas_src>
import functools

import jax
import jax.numpy as jnp
from jax.experimental import pallas as pl
from jax.experimental.pallas import tpu as pltpu


def _round_up(x: int, m: int) -> int:
    return ((x + m - 1) // m) * m


def _qnet_kernel(x_ref, w1_ref, b1_ref, w2_ref, b2_ref, w3_ref, b3_ref, o_ref,
                 *, n_actions: int):
    # One batch tile per grid step; weights/biases have a constant index map
    # so they are fetched into VMEM once and reused every step.
    x = x_ref[...]
    h1 = jnp.dot(x, w1_ref[...], preferred_element_type=jnp.float32) + b1_ref[...]
    h1 = jnp.maximum(h1, 0.0)
    h2 = jnp.dot(h1, w2_ref[...], preferred_element_type=jnp.float32) + b2_ref[...]
    h2 = jnp.maximum(h2, 0.0)
    out = jnp.dot(h2, w3_ref[...], preferred_element_type=jnp.float32) + b3_ref[...]
    # w3/b3 are lane-padded to 128 for the MXU; store only the real q-values.
    o_ref[...] = out[:, :n_actions].astype(o_ref.dtype)


def prepare_qnetwork_params(w1, b1, w2, b2, w3, b3):
    """One-time parameter prep (outside the forward hot path).

    Zero-pads hidden/output feature dims up to multiples of 128 (lane width);
    this is a mathematical no-op (ReLU(0)=0, zero rows/cols contribute
    nothing).  Weights are stored [in_features, out_features] so the kernel
    computes y = x @ W + b directly on the MXU.
    """
    f32 = jnp.float32
    obs_dim = w1.shape[0]
    n_actions = int(w3.shape[1])
    H1 = _round_up(w1.shape[1], 128)   # 120 -> 128
    H2 = _round_up(w2.shape[1], 128)   # 84  -> 128
    NO = _round_up(n_actions, 128)     # 4   -> 128 (MXU side only)

    w1p = jnp.zeros((obs_dim, H1), f32).at[:, : w1.shape[1]].set(w1.astype(f32))
    b1p = jnp.zeros((1, H1), f32).at[:, : b1.shape[1]].set(b1.astype(f32))
    w2p = jnp.zeros((H1, H2), f32).at[: w2.shape[0], : w2.shape[1]].set(w2.astype(f32))
    b2p = jnp.zeros((1, H2), f32).at[:, : b2.shape[1]].set(b2.astype(f32))
    w3p = jnp.zeros((H2, NO), f32).at[: w3.shape[0], :n_actions].set(w3.astype(f32))
    b3p = jnp.zeros((1, NO), f32).at[:, :n_actions].set(b3.astype(f32))
    return (w1p, b1p, w2p, b2p, w3p, b3p), n_actions


@functools.partial(jax.jit, static_argnames=("n_actions", "block_b"))
def qnetwork_forward(x, w1p, b1p, w2p, b2p, w3p, b3p, *, n_actions, block_b=2048):
    """x: [B, obs_dim] f32, pre-padded params -> q-values [B, n_actions] f32."""
    batch, obs_dim = x.shape

    # Batch tile: multiple of 8 (sublane granule), large enough to amortize
    # per-grid-step overhead, but sized so the grid has >= 2 steps when the
    # batch allows it (lets the "parallel" axis shard across both v7x TCs).
    tb = min(block_b, max(8, _round_up(pl.cdiv(batch, 2), 8)))
    grid = (pl.cdiv(batch, tb),)   # ragged last block: OOB rows never written

    def resident(arr):
        # Full-array block with a constant index map -> stays in VMEM across
        # all grid steps (fetched once, no per-step DMA).
        return pl.BlockSpec(arr.shape, lambda i: (0, 0))

    kernel = functools.partial(_qnet_kernel, n_actions=n_actions)

    return pl.pallas_call(
        kernel,
        out_shape=jax.ShapeDtypeStruct((batch, n_actions), jnp.float32),
        grid=grid,
        in_specs=[
            pl.BlockSpec((tb, obs_dim), lambda i: (i, 0)),   # batch-tiled input
            resident(w1p), resident(b1p),
            resident(w2p), resident(b2p),
            resident(w3p), resident(b3p),
        ],
        # True-width output (no 128-lane padding, no post-kernel slice).
        out_specs=pl.BlockSpec((tb, n_actions), lambda i: (i, 0)),
        compiler_params=pltpu.CompilerParams(
            dimension_semantics=("parallel",),   # megacore sharding on v7x
        ),
    )(x, w1p, b1p, w2p, b2p, w3p, b3p)


def init_qnetwork_params(key, obs_dim, n_actions):
    """torch.nn.Linear-style init: U[-1/sqrt(fan_in), +1/sqrt(fan_in)]."""
    dims = [(obs_dim, 120), (120, 84), (84, n_actions)]
    params = []
    for fan_in, fan_out in dims:
        key, kw, kb = jax.random.split(key, 3)
        bound = 1.0 / jnp.sqrt(float(fan_in))
        w = jax.random.uniform(kw, (fan_in, fan_out), jnp.float32, -bound, bound)
        b = jax.random.uniform(kb, (1, fan_out), jnp.float32, -bound, bound)
        params.extend([w, b])
    return tuple(params)


if __name__ == "__main__":
    key = jax.random.PRNGKey(0)

    # Small synthetic env: observation_space.shape = (8,), action_space.n = 4
    batch = 8
    obs_dim = 8
    n_actions = 4

    key, kx = jax.random.split(key)
    x = jax.random.normal(kx, (batch, obs_dim), dtype=jnp.float32)

    w1, b1, w2, b2, w3, b3 = init_qnetwork_params(key, obs_dim, n_actions)

    # One-time parameter prep (outside the hot path).
    padded_params, n_act = prepare_qnetwork_params(w1, b1, w2, b2, w3, b3)

    q = qnetwork_forward(x, *padded_params, n_actions=n_act)
    q = jax.block_until_ready(q)

    # Reference check in plain JAX (same math, same params).
    h1 = jnp.maximum(x @ w1 + b1, 0.0)
    h2 = jnp.maximum(h1 @ w2 + b2, 0.0)
    ref = h2 @ w3 + b3
    assert q.shape == (batch, n_actions)
    assert jnp.allclose(q, ref, atol=1e-5, rtol=1e-5)

    # Larger, non-tile-aligned batch: exercises the ragged multi-step grid
    # (and the >= 2-step split used for v7x megacore sharding).
    key, kx2 = jax.random.split(key)
    x_big = jax.random.normal(kx2, (1000, obs_dim), dtype=jnp.float32)
    q_big = jax.block_until_ready(
        qnetwork_forward(x_big, *padded_params, n_actions=n_act))
    ref_big = jnp.maximum(jnp.maximum(x_big @ w1 + b1, 0.0) @ w2 + b2, 0.0) @ w3 + b3
    assert q_big.shape == (1000, n_actions)
    assert jnp.allclose(q_big, ref_big, atol=1e-4, rtol=1e-4)

    print("KERNEL_OK")
</pallas_src>

<mosaic_0001>
module attributes {stable_mosaic.version = 11 : i64} {
  func.func @_qnet_kernel(%arg0: i32, %arg1: memref<8x8xf32, #tpu.memory_space<vmem>>, %arg2: memref<8x128xf32, #tpu.memory_space<vmem>>, %arg3: memref<1x128xf32, #tpu.memory_space<vmem>>, %arg4: memref<128x128xf32, #tpu.memory_space<vmem>>, %arg5: memref<1x128xf32, #tpu.memory_space<vmem>>, %arg6: memref<128x128xf32, #tpu.memory_space<vmem>>, %arg7: memref<1x128xf32, #tpu.memory_space<vmem>>, %arg8: memref<8x4xf32, #tpu.memory_space<vmem>>) attributes {dimension_semantics = [#tpu.dimension_semantics<parallel>], iteration_bounds = array<i64: 1>, scalar_prefetch = 0 : i64, scratch_operands = 0 : i64, tpu.core_type = #tpu.core_type<tc>, window_params = [{transform_indices = @transform_0, window_bounds = array<i64: 8, 8>}, {pipeline_mode = #tpu.pipeline_mode<synchronous>, transform_indices = @transform_1, window_bounds = array<i64: 8, 128>}, {pipeline_mode = #tpu.pipeline_mode<synchronous>, transform_indices = @transform_2, window_bounds = array<i64: 1, 128>}, {pipeline_mode = #tpu.pipeline_mode<synchronous>, transform_indices = @transform_3, window_bounds = array<i64: 128, 128>}, {pipeline_mode = #tpu.pipeline_mode<synchronous>, transform_indices = @transform_4, window_bounds = array<i64: 1, 128>}, {pipeline_mode = #tpu.pipeline_mode<synchronous>, transform_indices = @transform_5, window_bounds = array<i64: 128, 128>}, {pipeline_mode = #tpu.pipeline_mode<synchronous>, transform_indices = @transform_6, window_bounds = array<i64: 1, 128>}, {transform_indices = @transform_7, window_bounds = array<i64: 8, 4>}]} {
    %c0 = arith.constant 0 : index
    %c0_0 = arith.constant 0 : index
    %0 = vector.load %arg1[%c0, %c0_0] : memref<8x8xf32, #tpu.memory_space<vmem>>, vector<8x8xf32>
    %c0_1 = arith.constant 0 : index
    %c0_2 = arith.constant 0 : index
    %1 = vector.load %arg2[%c0_1, %c0_2] : memref<8x128xf32, #tpu.memory_space<vmem>>, vector<8x128xf32>
    %cst = arith.constant dense<0.000000e+00> : vector<8x128xf32>
    %2 = tpu.matmul %0, %1, %cst {dimension_numbers = #tpu.dot_dimension_numbers<[1], [0], [0], [1], [0, 0, 1, 1], [], []>} : vector<8x8xf32>, vector<8x128xf32>, vector<8x128xf32> -> vector<8x128xf32>
    %c0_3 = arith.constant 0 : index
    %c0_4 = arith.constant 0 : index
    %3 = vector.load %arg3[%c0_3, %c0_4] : memref<1x128xf32, #tpu.memory_space<vmem>>, vector<1x128xf32>
    %4 = vector.broadcast %3 : vector<1x128xf32> to vector<8x128xf32>
    %5 = arith.addf %2, %4 : vector<8x128xf32>
    %cst_5 = arith.constant 0.000000e+00 : f32
    %6 = vector.broadcast %cst_5 : f32 to vector<8x128xf32>
    %7 = arith.maximumf %5, %6 : vector<8x128xf32>
    %c0_6 = arith.constant 0 : index
    %c0_7 = arith.constant 0 : index
    %8 = vector.load %arg4[%c0_6, %c0_7] : memref<128x128xf32, #tpu.memory_space<vmem>>, vector<128x128xf32>
    %cst_8 = arith.constant dense<0.000000e+00> : vector<8x128xf32>
    %9 = tpu.matmul %7, %8, %cst_8 {dimension_numbers = #tpu.dot_dimension_numbers<[1], [0], [0], [1], [0, 0, 1, 1], [], []>} : vector<8x128xf32>, vector<128x128xf32>, vector<8x128xf32> -> vector<8x128xf32>
    %c0_9 = arith.constant 0 : index
    %c0_10 = arith.constant 0 : index
    %10 = vector.load %arg5[%c0_9, %c0_10] : memref<1x128xf32, #tpu.memory_space<vmem>>, vector<1x128xf32>
    %11 = vector.broadcast %10 : vector<1x128xf32> to vector<8x128xf32>
    %12 = arith.addf %9, %11 : vector<8x128xf32>
    %cst_11 = arith.constant 0.000000e+00 : f32
    %13 = vector.broadcast %cst_11 : f32 to vector<8x128xf32>
    %14 = arith.maximumf %12, %13 : vector<8x128xf32>
    %c0_12 = arith.constant 0 : index
    %c0_13 = arith.constant 0 : index
    %15 = vector.load %arg6[%c0_12, %c0_13] : memref<128x128xf32, #tpu.memory_space<vmem>>, vector<128x128xf32>
    %cst_14 = arith.constant dense<0.000000e+00> : vector<8x128xf32>
    %16 = tpu.matmul %14, %15, %cst_14 {dimension_numbers = #tpu.dot_dimension_numbers<[1], [0], [0], [1], [0, 0, 1, 1], [], []>} : vector<8x128xf32>, vector<128x128xf32>, vector<8x128xf32> -> vector<8x128xf32>
    %c0_15 = arith.constant 0 : index
    %c0_16 = arith.constant 0 : index
    %17 = vector.load %arg7[%c0_15, %c0_16] : memref<1x128xf32, #tpu.memory_space<vmem>>, vector<1x128xf32>
    %18 = vector.broadcast %17 : vector<1x128xf32> to vector<8x128xf32>
    %19 = arith.addf %16, %18 : vector<8x128xf32>
    %20 = vector.extract_strided_slice %19 {offsets = [0, 0], sizes = [8, 4], strides = [1, 1]} : vector<8x128xf32> to vector<8x4xf32>
    %c0_17 = arith.constant 0 : index
    %c0_18 = arith.constant 0 : index
    %21 = vector.load %arg8[%c0_17, %c0_18] : memref<8x4xf32, #tpu.memory_space<vmem>>, vector<8x4xf32>
    tpu.vector_store %arg8[%c0_17, %c0_18], %20 {strides = array<i32>} : memref<8x4xf32, #tpu.memory_space<vmem>>, vector<8x4xf32>,
    return
  }
  func.func @transform_0(%arg0: i32) -> (i32, i32) {
    %c0_i32 = arith.constant 0 : i32
    %c0_i32_0 = arith.constant 0 : i32
    return %arg0, %c0_i32 : i32, i32
  }
  func.func @transform_1(%arg0: i32) -> (i32, i32) {
    %c0_i32 = arith.constant 0 : i32
    %c0_i32_0 = arith.constant 0 : i32
    %c0_i32_1 = arith.constant 0 : i32
    return %c0_i32, %c0_i32_0 : i32, i32
  }
  func.func @transform_2(%arg0: i32) -> (i32, i32) {
    %c0_i32 = arith.constant 0 : i32
    %c0_i32_0 = arith.constant 0 : i32
    %c0_i32_1 = arith.constant 0 : i32
    return %c0_i32, %c0_i32_0 : i32, i32
  }
  func.func @transform_3(%arg0: i32) -> (i32, i32) {
    %c0_i32 = arith.constant 0 : i32
    %c0_i32_0 = arith.constant 0 : i32
    %c0_i32_1 = arith.constant 0 : i32
    return %c0_i32, %c0_i32_0 : i32, i32
  }
  func.func @transform_4(%arg0: i32) -> (i32, i32) {
    %c0_i32 = arith.constant 0 : i32
    %c0_i32_0 = arith.constant 0 : i32
    %c0_i32_1 = arith.constant 0 : i32
    return %c0_i32, %c0_i32_0 : i32, i32
  }
  func.func @transform_5(%arg0: i32) -> (i32, i32) {
    %c0_i32 = arith.constant 0 : i32
    %c0_i32_0 = arith.constant 0 : i32
    %c0_i32_1 = arith.constant 0 : i32
    return %c0_i32, %c0_i32_0 : i32, i32
  }
  func.func @transform_6(%arg0: i32) -> (i32, i32) {
    %c0_i32 = arith.constant 0 : i32
    %c0_i32_0 = arith.constant 0 : i32
    %c0_i32_1 = arith.constant 0 : i32
    return %c0_i32, %c0_i32_0 : i32, i32
  }
  func.func @transform_7(%arg0: i32) -> (i32, i32) {
    %c0_i32 = arith.constant 0 : i32
    %c0_i32_0 = arith.constant 0 : i32
    return %arg0, %c0_i32 : i32, i32
  }
}

</mosaic_0001>

<llo_original>
// kernel: qnetwork_forward.1
$region0: #{qnetwork_forward.1}
  #allocation0 [shape = 'u32[]', space=smem, size = 0x4, offset = 0x4, fixed_abs, tag = 'smem constant byte address 0x4 - core index']
  #allocation1 [shape = 'u32[72,128]{1,0:T(1,128)}', space=vmem, size = 0x9000, scoped, tag = 'internal scratch']
  %s0 = inlined_call_operand.hbm [shape: f32[8,8], index: 0, kind: input, shape index: {}]
  %s1 = inlined_call_operand.hbm [shape: f32[8,128], index: 1, kind: input, shape index: {}]
  %s2 = inlined_call_operand.vmem [shape: f32[1,128], index: 2, kind: input, shape index: {}]
  %s3 = inlined_call_operand.hbm [shape: f32[128,128], index: 3, kind: input, shape index: {}]
  %s4 = inlined_call_operand.vmem [shape: f32[1,128], index: 4, kind: input, shape index: {}]
  %s5 = inlined_call_operand.hbm [shape: f32[128,128], index: 5, kind: input, shape index: {}]
  %s6 = inlined_call_operand.vmem [shape: f32[1,128], index: 6, kind: input, shape index: {}]
  %s7 = inlined_call_operand.vmem [shape: f32[8,4], index: 7, kind: output, shape index: {}]
  %s8 = sld [smem:[#allocation0]]
  $region54: #{qnetwork_forward.1} parent=0
    _
  %s10 = ssub.s32 1, %s8
  %s11 = scalar_select 0, %s10, %s8
  $region1: #{qnetwork_forward.1} parent=0
    #allocation2 [shape = 'u8[4096]{0}', space=vmem, size = 0x1000, scoped, tag = 'input window, operand 0, single buffered']
    #allocation3 [shape = 's32[1]{0}', space=sflag, size = 0x4, scoped, tag = 'scoped memory for qnetwork_forward.1']
    #allocation4 [shape = 'u8[4096]{0}', space=vmem, size = 0x1000, scoped, tag = 'input window, operand 1, single buffered']
    #allocation5 [shape = 's32[1]{0}', space=sflag, size = 0x4, scoped, tag = 'scoped memory for qnetwork_forward.1']
    #allocation6 [shape = 'u8[65536]{0}', space=vmem, size = 0x10000, scoped, tag = 'input window, operand 3, single buffered']
    #allocation7 [shape = 'u8[65536]{0}', space=vmem, size = 0x10000, scoped, tag = 'input window, operand 5, single buffered']
    #allocation8 [shape = 's32[1]{0}', space=sflag, size = 0x4, scoped, tag = 'scoped memory for qnetwork_forward.1']
    %12 = vsyncpa [#allocation3], 0
    %13 = vsyncpa [#allocation5], 0
    %14 = vsyncpa [#allocation8], 0
    // Predicated region
    $region2: #{qnetwork_forward.1} parent=1 // pred_check
      _
    $region3: #{qnetwork_forward.1} parent=1 // pred_check_branch
      %16 = sbr.rel (0) target = $region5
    $region4: #{qnetwork_forward.1} parent=1 // pred_region
      %18 = vsyncadd [#allocation3], 0
      %s20 = sshll.u32 %s0, 4
      %s21 = int_to_ptr.hbm [resolvable:$true] %s20
      %s22 = sshll.u32 [#allocation2], 4
      %s23 = int_to_ptr.vmem [resolvable:$true] %s22
      %25 = dma.hbm_to_vmem [thread:$0]  %s21, 128, %s23, [#allocation3]
    $region5: #{qnetwork_forward.1} parent=1 // pred_fallthru
      _
    // Predicated region
    $region6: #{qnetwork_forward.1} parent=1 // pred_check
      _
    $region7: #{qnetwork_forward.1} parent=1 // pred_check_branch
      %27 = sbr.rel (0) target = $region9
    $region8: #{qnetwork_forward.1} parent=1 // pred_region
      %29 = vsyncadd [#allocation5], 0
      %s31 = sshll.u32 %s1, 4
      %s32 = int_to_ptr.hbm [resolvable:$true] %s31
      %s33 = sshll.u32 [#allocation4], 4
      %s34 = int_to_ptr.vmem [resolvable:$true] %s33
      %36 = dma.hbm_to_vmem [thread:$0]  %s32, 128, %s34, [#allocation5]
    $region9: #{qnetwork_forward.1} parent=1 // pred_fallthru
      _
    // Predicated region
    $region10: #{qnetwork_forward.1} parent=1 // pred_check
      _
    $region11: #{qnetwork_forward.1} parent=1 // pred_check_branch
      %38 = sbr.rel (0) target = $region13
    $region12: #{qnetwork_forward.1} parent=1 // pred_region
      _
    $region13: #{qnetwork_forward.1} parent=1 // pred_fallthru
      _
    // Predicated region
    $region14: #{qnetwork_forward.1} parent=1 // pred_check
      _
    $region15: #{qnetwork_forward.1} parent=1 // pred_check_branch
      %40 = sbr.rel (0) target = $region17
    $region16: #{qnetwork_forward.1} parent=1 // pred_region
      %42 = vsyncadd [#allocation5], 0
      %s43 = sshll.u32 %s3, 4
      %s44 = int_to_ptr.hbm [resolvable:$true] %s43
      %s45 = sshll.u32 [#allocation6], 4
      %s46 = int_to_ptr.vmem [resolvable:$true] %s45
      %51 = dma.hbm_to_vmem [thread:$0]  %s44, 2048, %s46, [#allocation5], 128, 128, 8
    $region17: #{qnetwork_forward.1} parent=1 // pred_fallthru
      _
    // Predicated region
    $region18: #{qnetwork_forward.1} parent=1 // pred_check
      _
    $region19: #{qnetwork_forward.1} parent=1 // pred_check_branch
      %53 = sbr.rel (0) target = $region21
    $region20: #{qnetwork_forward.1} parent=1 // pred_region
      _
    $region21: #{qnetwork_forward.1} parent=1 // pred_fallthru
      _
    // Predicated region
    $region22: #{qnetwork_forward.1} parent=1 // pred_check
      _
    $region23: #{qnetwork_forward.1} parent=1 // pred_check_branch
      %55 = sbr.rel (0) target = $region25
    $region24: #{qnetwork_forward.1} parent=1 // pred_region
      %57 = vsyncadd [#allocation8], 0
      %s58 = sshll.u32 %s5, 4
      %s59 = int_to_ptr.hbm [resolvable:$true] %s58
      %s60 = sshll.u32 [#allocation7], 4
      %s61 = int_to_ptr.vmem [resolvable:$true] %s60
      %66 = dma.hbm_to_vmem [thread:$0]  %s59, 2048, %s61, [#allocation8], 128, 128, 8
    $region25: #{qnetwork_forward.1} parent=1 // pred_fallthru
      _
    // Predicated region
    $region26: #{qnetwork_forward.1} parent=1 // pred_check
      _
    $region27: #{qnetwork_forward.1} parent=1 // pred_check_branch
      %68 = sbr.rel (0) target = $region29
    $region28: #{qnetwork_forward.1} parent=1 // pred_region
      _
    $region29: #{qnetwork_forward.1} parent=1 // pred_fallthru
      _
    // Predicated region
    $region30: #{qnetwork_forward.1} parent=1 // pred_check
      _
    $region31: #{qnetwork_forward.1} parent=1 // pred_check_branch
      %70 = sbr.rel (0) target = $region33
    $region32: #{qnetwork_forward.1} parent=1 // pred_region
      %72 = dma.done [#allocation3], 128
    $region33: #{qnetwork_forward.1} parent=1 // pred_fallthru
      _
    // Predicated region
    $region34: #{qnetwork_forward.1} parent=1 // pred_check
      _
    $region35: #{qnetwork_forward.1} parent=1 // pred_check_branch
      %74 = sbr.rel (0) target = $region37
    $region36: #{qnetwork_forward.1} parent=1 // pred_region
      %76 = dma.done [#allocation5], 128
    $region37: #{qnetwork_forward.1} parent=1 // pred_fallthru
      _
    // Predicated region
    $region38: #{qnetwork_forward.1} parent=1 // pred_check
      _
    $region39: #{qnetwork_forward.1} parent=1 // pred_check_branch
      %78 = sbr.rel (0) target = $region41
    $region40: #{qnetwork_forward.1} parent=1 // pred_region
      %80 = dma.done [#allocation5], 2048
    $region41: #{qnetwork_forward.1} parent=1 // pred_fallthru
      _
    // Predicated region
    $region42: #{qnetwork_forward.1} parent=1 // pred_check
      _
    $region43: #{qnetwork_forward.1} parent=1 // pred_check_branch
      %82 = sbr.rel (0) target = $region45
    $region44: #{qnetwork_forward.1} parent=1 // pred_region
      %84 = dma.done [#allocation8], 2048
    $region45: #{qnetwork_forward.1} parent=1 // pred_fallthru
      _
    %v85 = vld [vmem:[#allocation2] sm:$0xff]
    %v86 = vld [vmem:[#allocation4] sm:$0xff]
    %v87 = vld [vmem:[%s2] sm:$0x1]
    %v89 = vperm.slane %v87, 0
    %vm91 = vcmask 64512
    %v93 = vsel %vm91, %v85, 0
    %95 = vmatpush.msra.mxu0 0.0
    %96 = vmatpush.msra.mxu0 0.0
    %97 = vmatpush.msra.mxu0 0.0
    %98 = vmatpush.msra.mxu0 0.0
    %99 = vmatpush.msra.mxu0 0.0
    %100 = vmatpush.msra.mxu0 0.0
    %101 = vmatpush.msra.mxu0 0.0
    %102 = vmatpush.msra.mxu0 0.0
    %103 = vmatpush.msra.mxu0 0.0
    %104 = vmatpush.msra.mxu0 0.0
    %105 = vmatpush.msra.mxu0 0.0
    %106 = vmatpush.msra.mxu0 0.0
    %107 = vmatpush.msra.mxu0 0.0
    %108 = vmatpush.msra.mxu0 0.0
    %109 = vmatpush.msra.mxu0 0.0
    %110 = vmatpush.msra.mxu0 %v86
    %111 = vmatmul.f32.gmra.mxu0 %v93
    %v112 = vpop.f32.mrf.mxu0
    %v113 = vadd.f32 %v89, %v112
    %114 = vdwg.mxu0
    %v115 = vmax.f32 %v113, 0.0
    %v116 = vld [vmem:[#allocation6] sm:$0xff]
    %v117 = vld [vmem:[#allocation6 + $0x8] sm:$0xff]
    %v118 = vld [vmem:[#allocation6 + $0x10] sm:$0xff]
    %v119 = vld [vmem:[#allocation6 + $0x18] sm:$0xff]
    %v120 = vld [vmem:[#allocation6 + $0x20] sm:$0xff]
    %v121 = vld [vmem:[#allocation6 + $0x28] sm:$0xff]
    %v122 = vld [vmem:[#allocation6 + $0x30] sm:$0xff]
    %v123 = vld [vmem:[#allocation6 + $0x38] sm:$0xff]
    %v124 = vld [vmem:[#allocation6 + $0x40] sm:$0xff]
    %v125 = vld [vmem:[#allocation6 + $0x48] sm:$0xff]
    %v126 = vld [vmem:[#allocation6 + $0x50] sm:$0xff]
    %v127 = vld [vmem:[#allocation6 + $0x58] sm:$0xff]
    %v128 = vld [vmem:[#allocation6 + $0x60] sm:$0xff]
    %v129 = vld [vmem:[#allocation6 + $0x68] sm:$0xff]
    %v130 = vld [vmem:[#allocation6 + $0x70] sm:$0xff]
    %v131 = vld [vmem:[#allocation6 + $0x78] sm:$0xff]
    %v132 = vld [vmem:[%s4] sm:$0x1]
    %v134 = vperm.slane %v132, 0
    %136 = vmatpush.msra.mxu0 %v131
    %137 = vmatpush.msra.mxu0 %v130
    %138 = vmatpush.msra.mxu0 %v129
    %139 = vmatpush.msra.mxu0 %v128
    %140 = vmatpush.msra.mxu0 %v127
    %141 = vmatpush.msra.mxu0 %v126
    %142 = vmatpush.msra.mxu0 %v125
    %143 = vmatpush.msra.mxu0 %v124
    %144 = vmatpush.msra.mxu0 %v123
    %145 = vmatpush.msra.mxu0 %v122
    %146 = vmatpush.msra.mxu0 %v121
    %147 = vmatpush.msra.mxu0 %v120
    %148 = vmatpush.msra.mxu0 %v119
    %149 = vmatpush.msra.mxu0 %v118
    %150 = vmatpush.msra.mxu0 %v117
    %151 = vmatpush.msra.mxu0 %v116
    %152 = vmatmul.f32.gmra.mxu0 %v115
    %v153 = vpop.f32.mrf.mxu0
    %v154 = vadd.f32 %v134, %v153
    %155 = vdwg.mxu0
    %v156 = vmax.f32 %v154, 0.0
    %v157 = vld [vmem:[#allocation7] sm:$0xff]
    %v158 = vld [vmem:[#allocation7 + $0x8] sm:$0xff]
    %v159 = vld [vmem:[#allocation7 + $0x10] sm:$0xff]
    %v160 = vld [vmem:[#allocation7 + $0x18] sm:$0xff]
    %v161 = vld [vmem:[#allocation7 + $0x20] sm:$0xff]
    %v162 = vld [vmem:[#allocation7 + $0x28] sm:$0xff]
    %v163 = vld [vmem:[#allocation7 + $0x30] sm:$0xff]
    %v164 = vld [vmem:[#allocation7 + $0x38] sm:$0xff]
    %v165 = vld [vmem:[#allocation7 + $0x40] sm:$0xff]
    %v166 = vld [vmem:[#allocation7 + $0x48] sm:$0xff]
    %v167 = vld [vmem:[#allocation7 + $0x50] sm:$0xff]
    %v168 = vld [vmem:[#allocation7 + $0x58] sm:$0xff]
    %v169 = vld [vmem:[#allocation7 + $0x60] sm:$0xff]
    %v170 = vld [vmem:[#allocation7 + $0x68] sm:$0xff]
    %v171 = vld [vmem:[#allocation7 + $0x70] sm:$0xff]
    %v172 = vld [vmem:[#allocation7 + $0x78] sm:$0xff]
    %v173 = vld [vmem:[%s6] sm:$0x1]
    %v175 = vperm.slane %v173, 0
    %177 = vmatpush.msra.mxu0 %v172
    %178 = vmatpush.msra.mxu0 %v171
    %179 = vmatpush.msra.mxu0 %v170
    %180 = vmatpush.msra.mxu0 %v169
    %181 = vmatpush.msra.mxu0 %v168
    %182 = vmatpush.msra.mxu0 %v167
    %183 = vmatpush.msra.mxu0 %v166
    %184 = vmatpush.msra.mxu0 %v165
    %185 = vmatpush.msra.mxu0 %v164
    %186 = vmatpush.msra.mxu0 %v163
    %187 = vmatpush.msra.mxu0 %v162
    %188 = vmatpush.msra.mxu0 %v161
    %189 = vmatpush.msra.mxu0 %v160
    %190 = vmatpush.msra.mxu0 %v159
    %191 = vmatpush.msra.mxu0 %v158
    %192 = vmatpush.msra.mxu0 %v157
    %193 = vmatmul.f32.gmra.mxu0 %v156
    %v194 = vpop.f32.mrf.mxu0
    %v195 = vadd.f32 %v175, %v194
    %196 = vdwg.mxu0
    %vm197 = vcmask 31744
    %198 = vst.msk [vmem:[%s7] sm:$0xff] %vm197, %v195
    // Predicated region
    $region46: #{qnetwork_forward.1} parent=1 // pred_check
      _
    $region47: #{qnetwork_forward.1} parent=1 // pred_check_branch
      %200 = sbr.rel (0) target = $region49
    $region48: #{qnetwork_forward.1} parent=1 // pred_region
      _
    $region49: #{qnetwork_forward.1} parent=1 // pred_fallthru
      _
    // Predicated region
    $region50: #{qnetwork_forward.1} parent=1 // pred_check
      _
    $region51: #{qnetwork_forward.1} parent=1 // pred_check_branch
      %202 = sbr.rel (0) target = $region53
    $region52: #{qnetwork_forward.1} parent=1 // pred_region
      _
    $region53: #{qnetwork_forward.1} parent=1 // pred_fallthru
      _
    %203 = vsyncpa [#allocation3], 1
    %204 = vsyncpa [#allocation5], 1
    %205 = vsyncpa [#allocation8], 1

</llo_original>
